<compile_context>
chip_gen: v5e
topology: v5e:2x2
jax: 0.10.0
libtpu: 0.0.40
codegen_flags: <defaults>
</compile_context>

<pallas_src>
import math
import numpy as np
import jax
import jax.numpy as jnp
from jax.experimental import pallas as pl
from jax.experimental.pallas import tpu as pltpu

NODE_DIM = 128          # node_dim default in the module
EDGE_DIM = 128          # edge_dim default in the module
N_NODES = 100           # fixed by the module (self.param has 100 entries)
EDGE_TILE = 2048        # max rows per edge-MLP tile (multiple of 8)
NODE_BB_MAX = 64        # max graphs per node-update grid step


# ----------------------------------------------------------------------------
# Kernel 1: calc_attn + residual  (node-update hot path, BB graphs per step)
# ----------------------------------------------------------------------------
def _attn_kernel(mol_ref, kq_ref, bqk_ref, v_ref, cell_ref, mask_ref, param_ref,
                 out_ref):
    mol = mol_ref[...]                 # (BB, 100, D) f32
    kq = kq_ref[...]                   # (BB, 1, D)   = (cell@Wk^T+bk) @ Wq
    bqk = bqk_ref[...]                 # (BB, 1, 1)   = bq . k
    v = v_ref[...]                     # (BB, 1, D)
    cell = cell_ref[...]               # (BB, 1, D)
    mask = mask_ref[...]               # (BB, 100, 1) f32, 1.0 == masked (padding)
    param = param_ref[...]             # (100, 1)

    # logits_n = q_n . k  ==  mol_n . kq + bq.k   (Q projection collapsed away)
    logits = jnp.sum(mol * kq, axis=-1, keepdims=True) + bqk       # (BB, 100, 1)
    logits = jnp.where(mask > 0.5, -1e9, logits)

    # softmax over the 100 nodes (per graph), then / sqrt(node_dim)
    m = jnp.max(logits, axis=1, keepdims=True)
    e = jnp.exp(logits - m)
    s = jnp.sum(e, axis=1, keepdims=True)
    # EUP reciprocal (free VLIW slot); constant scale folded into the same multiply.
    attn = e * (pl.reciprocal(s, approx=True) * (1.0 / math.sqrt(NODE_DIM)))

    # attn_score = bmm(attn, value) -> outer product; masked cell expand; residual
    attn_score = attn * v                                           # (BB, 100, D)
    cell_masked = (1.0 - mask) * cell                               # (BB, 100, D)
    out_ref[...] = attn_score + param[None] * cell_masked + mol


def node_update(mol, cell, mask_f, param, kq, bqk, v):
    """mol: (B,100,D) f32, cell/kq/v: (B,D) f32, bqk: (B,), mask_f: (B,100) f32."""
    B, N, D = mol.shape
    assert (N, D) == (N_NODES, NODE_DIM)

    # Big blocks amortize the ~0.35us/step pipeline overhead; cap so the parallel
    # grid keeps >= 2 steps (v7x has 2 TensorCores sharded over "parallel" axes).
    BB = min(NODE_BB_MAX, B)
    if B >= 2:
        BB = min(BB, pl.cdiv(B, 2))
    nb = pl.cdiv(B, BB)
    # NOTE: no jnp.pad — Pallas masks the ragged last block; OOB rows compute
    # garbage (possibly NaN softmax) and are discarded on the masked write.

    mask3 = mask_f[:, :, None]                # (B, 100, 1)
    cell3 = cell[:, None, :]                  # (B, 1, D)
    kq3 = kq[:, None, :]                      # (B, 1, D)
    v3 = v[:, None, :]                        # (B, 1, D)
    bqk3 = bqk[:, None, None]                 # (B, 1, 1)
    param2 = param[:, None]                   # (100, 1)

    cost = pl.CostEstimate(
        flops=8 * B * N * D,
        transcendentals=B * N,
        bytes_accessed=4 * (2 * B * N * D + 4 * B * D + B * N + N),
    )

    grid_spec = pltpu.PrefetchScalarGridSpec(
        num_scalar_prefetch=0,
        grid=(nb,),
        in_specs=[
            pl.BlockSpec((BB, N, D), lambda b: (b, 0, 0)),   # molecular x
            pl.BlockSpec((BB, 1, D), lambda b: (b, 0, 0)),   # kq
            pl.BlockSpec((BB, 1, 1), lambda b: (b, 0, 0)),   # bq . k
            pl.BlockSpec((BB, 1, D), lambda b: (b, 0, 0)),   # v
            pl.BlockSpec((BB, 1, D), lambda b: (b, 0, 0)),   # cell line
            pl.BlockSpec((BB, N, 1), lambda b: (b, 0, 0)),   # mask
            pl.BlockSpec((N, 1), lambda b: (0, 0)),          # param
        ],
        out_specs=pl.BlockSpec((BB, N, D), lambda b: (b, 0, 0)),
    )
    return pl.pallas_call(
        _attn_kernel,
        out_shape=jax.ShapeDtypeStruct((B, N, D), jnp.float32),
        grid_spec=grid_spec,
        compiler_params=pltpu.CompilerParams(
            dimension_semantics=("parallel",),
            vmem_limit_bytes=32 * 1024 * 1024,   # v7x: 64 MiB physical / 32 default
        ),
        cost_estimate=cost,
    )(mol, kq3, bqk3, v3, cell3, mask3, param2)


# ----------------------------------------------------------------------------
# Kernel 2: edge_linear MLP (128 -> 512 -> ReLU -> 256 -> ReLU -> 128) with the
# expand_cell gather fused in-kernel (one-hot matmul against a resident cell table).
# MXU runs on bf16 operands with f32 accumulation; dropout is identity at inference.
# ----------------------------------------------------------------------------
def _edge_kernel(gid_ref, cell_ref, e_ref,
                 w1T_ref, b1_ref, w2T_ref, b2_ref, w3T_ref, b3_ref,
                 out_ref):
    x = e_ref[...].astype(jnp.bfloat16)                           # (TE, 128)
    h1 = jnp.maximum(
        jnp.dot(x, w1T_ref[...], preferred_element_type=jnp.float32) + b1_ref[...], 0.0)
    h2 = jnp.maximum(
        jnp.dot(h1.astype(jnp.bfloat16), w2T_ref[...],
                preferred_element_type=jnp.float32) + b2_ref[...], 0.0)
    h3 = jnp.dot(h2.astype(jnp.bfloat16), w3T_ref[...],
                 preferred_element_type=jnp.float32) + b3_ref[...]

    # expand_cell gather: one cell row per edge, selected by graph id.  Kept in f32
    # so cell rows pass through (near-)verbatim, matching the reference add.
    # TODO(synk): for large B replace the O(TE*B) one-hot with an in-kernel gather
    # (jnp.take on the resident cell ref / scalar-prefetch-driven DMA gather).
    gid = gid_ref[...]                                            # (TE, 1) int32
    te = gid.shape[0]
    bp = cell_ref.shape[0]
    onehot = (gid == jax.lax.broadcasted_iota(jnp.int32, (te, bp), 1)).astype(jnp.float32)
    cell_rows = jnp.dot(onehot, cell_ref[...], preferred_element_type=jnp.float32)

    out_ref[...] = h3 + cell_rows


def edge_update(edge_attr, edge_gid, cell, w1T, b1, w2T, b2, w3T, b3):
    """edge_attr: (E, EDGE_DIM); edge_gid: (E,) int32 graph id per edge;
    cell: (B, EDGE_DIM).  Returns (E, EDGE_DIM)."""
    E, D = edge_attr.shape
    B = cell.shape[0]

    # Cell table kept resident in VMEM; pad rows to a multiple of 8 sublanes.
    B_pad = max(8, pl.cdiv(B, 8) * 8)
    cell_pad = jnp.pad(cell, ((0, B_pad - B), (0, 0))) if B_pad != B else cell

    # Big tile (long-M MXU passes); ragged last block handled by Pallas (OOB rows
    # compute garbage and are discarded on the masked write).  Cap at ceil(E/2)
    # rounded to 8 so the parallel grid keeps >= 2 steps for v7x's two TCs.
    te_cap = max(8, pl.cdiv(pl.cdiv(E, 2), 8) * 8)
    te = min(EDGE_TILE, te_cap)
    grid = (pl.cdiv(E, te),)

    gid2 = edge_gid.astype(jnp.int32)[:, None]                   # (E, 1)
    b1r, b2r, b3r = b1[None, :], b2[None, :], b3[None, :]

    w_bytes = 2 * (D * 512 + 512 * 256 + 256 * D) + 4 * (512 + 256 + D)
    cost = pl.CostEstimate(
        flops=2 * E * (D * 512 + 512 * 256 + 256 * D),
        transcendentals=0,
        bytes_accessed=4 * (2 * E * D + E + B_pad * D) + w_bytes,
    )

    # NOTE: grid-invariant inputs (cell table, weights/biases) could be single-
    # buffered via pipeline_mode=pl.Buffered(1); omitted for compatibility — VMEM
    # is not a constraint at these sizes (~12 MiB total at te=2048).
    grid_spec = pltpu.PrefetchScalarGridSpec(
        num_scalar_prefetch=0,
        grid=grid,
        in_specs=[
            pl.BlockSpec((te, 1), lambda i: (i, 0)),             # per-edge graph id
            pl.BlockSpec((B_pad, D), lambda i: (0, 0)),          # cell table (resident)
            pl.BlockSpec((te, D), lambda i: (i, 0)),             # edge_attr tile
            pl.BlockSpec((D, 512), lambda i: (0, 0)),
            pl.BlockSpec((1, 512), lambda i: (0, 0)),
            pl.BlockSpec((512, 256), lambda i: (0, 0)),
            pl.BlockSpec((1, 256), lambda i: (0, 0)),
            pl.BlockSpec((256, D), lambda i: (0, 0)),
            pl.BlockSpec((1, D), lambda i: (0, 0)),
        ],
        out_specs=pl.BlockSpec((te, D), lambda i: (i, 0)),
    )
    return pl.pallas_call(
        _edge_kernel,
        out_shape=jax.ShapeDtypeStruct((E, D), jnp.float32),
        grid_spec=grid_spec,
        compiler_params=pltpu.CompilerParams(
            dimension_semantics=("parallel",),
            vmem_limit_bytes=32 * 1024 * 1024,
        ),
        cost_estimate=cost,
    )(gid2, cell_pad, edge_attr, w1T, b1r, w2T, b2r, w3T, b3r)


# ----------------------------------------------------------------------------
# One-time parameter prep (transposes + bf16 MXU casts hoisted out of forward)
# ----------------------------------------------------------------------------
def prepare_params(params):
    p = dict(params)
    p["wkT"] = params["wk"].T
    p["wvT"] = params["wv"].T
    # Edge-MLP weights run on the MXU in bf16 (f32 accumulation); cast once here.
    p["we1T"] = params["we1"].T.astype(jnp.bfloat16)
    p["we2T"] = params["we2"].T.astype(jnp.bfloat16)
    p["we3T"] = params["we3"].T.astype(jnp.bfloat16)
    return p


# ----------------------------------------------------------------------------
# CellPropagation.forward glue
# ----------------------------------------------------------------------------
def cell_propagation_forward(prep, graph_x, mask_bool, edge_attr, edge_counts, cell):
    B = cell.shape[0]
    mol = graph_x.astype(jnp.float32).reshape(B, N_NODES, NODE_DIM)
    mask_f = mask_bool.astype(jnp.float32)

    # Hoisted node-path precompute: tiny (B,128) matmuls, done once per forward
    # instead of once per grid step.  logits later = mol . kq + bq.k
    hi = jax.lax.Precision.HIGHEST
    k = jnp.dot(cell, prep["wkT"], precision=hi) + prep["bk"]     # (B, D) = linear_k(cell)
    v = jnp.dot(cell, prep["wvT"], precision=hi) + prep["bv"]     # (B, D) = linear_v(cell)
    kq = jnp.dot(k, prep["wq"], precision=hi)                     # (B, D) = Wq^T contracted with k
    bqk = jnp.dot(k, prep["bq"], precision=hi)                    # (B,)   = bq . k

    new_mol = node_update(mol, cell, mask_f, prep["param"], kq, bqk, v)
    new_x = new_mol.reshape(-1, NODE_DIM)

    # Edge propagation branch (is_learn=False -> no edge_param scaling).
    # TODO(synk): torch.repeat_interleave over ragged per-graph edge counts is
    # data-dependent; the per-edge graph ids are built in glue from concrete counts
    # and the cell-row gather itself happens inside the edge kernel.
    E = edge_attr.shape[0]
    edge_gid = jnp.repeat(jnp.arange(B, dtype=jnp.int32), edge_counts,
                          total_repeat_length=E)
    new_edge_attr = edge_update(edge_attr, edge_gid, cell,
                                prep["we1T"], prep["be1"],
                                prep["we2T"], prep["be2"],
                                prep["we3T"], prep["be3"])
    return new_x, new_edge_attr


# ----------------------------------------------------------------------------
# Pure-JAX reference (mirrors the PyTorch forward) for a correctness check
# ----------------------------------------------------------------------------
def reference_forward(params, graph_x, mask_bool, edge_attr, edge_counts, cell):
    B = cell.shape[0]
    mol = graph_x.astype(jnp.float32).reshape(B, N_NODES, NODE_DIM)
    cell3 = cell.reshape(B, 1, NODE_DIM)

    q = mol @ params["wq"].T + params["bq"]
    k = cell3 @ params["wk"].T + params["bk"]
    v = cell3 @ params["wv"].T + params["bv"]
    attn = jnp.squeeze(q @ jnp.swapaxes(k, 1, 2), -1)             # (B, 100)
    attn = jnp.where(mask_bool, -1e9, attn)
    attn = (jax.nn.softmax(attn, axis=-1) / math.sqrt(NODE_DIM))[..., None]
    attn_score = attn @ v                                          # (B, 100, D)
    cell_expand = jnp.broadcast_to(cell3, (B, N_NODES, NODE_DIM))
    keep = (~mask_bool)[..., None].astype(jnp.float32)
    out = attn_score + params["param"].reshape(1, -1, 1) * (keep * cell_expand)
    new_x = (out + mol).reshape(-1, NODE_DIM)

    expand_cell = jnp.repeat(cell, edge_counts, axis=0,
                             total_repeat_length=int(np.sum(edge_counts)))
    h = jnp.maximum(edge_attr @ params["we1"].T + params["be1"], 0.0)
    h = jnp.maximum(h @ params["we2"].T + params["be2"], 0.0)
    new_edge = h @ params["we3"].T + params["be3"] + expand_cell
    return new_x, new_edge


if __name__ == "__main__":
    key = jax.random.PRNGKey(0)
    ks = jax.random.split(key, 16)
    B = 2
    edge_counts = np.array([7, 9], dtype=np.int32)
    E = int(edge_counts.sum())

    def w(k, shape, scale=0.05):
        return scale * jax.random.normal(k, shape, dtype=jnp.float32)

    params = {
        "wq": w(ks[0], (NODE_DIM, NODE_DIM)), "bq": w(ks[1], (NODE_DIM,)),
        "wk": w(ks[2], (NODE_DIM, NODE_DIM)), "bk": w(ks[3], (NODE_DIM,)),
        "wv": w(ks[4], (NODE_DIM, NODE_DIM)), "bv": w(ks[5], (NODE_DIM,)),
        "we1": w(ks[6], (512, EDGE_DIM)), "be1": w(ks[7], (512,)),
        "we2": w(ks[8], (256, 512)),      "be2": w(ks[9], (256,)),
        "we3": w(ks[10], (EDGE_DIM, 256)), "be3": w(ks[11], (EDGE_DIM,)),
        "param": jax.random.normal(ks[12], (N_NODES,), dtype=jnp.float32),
    }
    prep = prepare_params(params)

    graph_x = jax.random.normal(ks[13], (B * N_NODES, NODE_DIM), dtype=jnp.float32)
    cell = jax.random.normal(ks[14], (B, NODE_DIM), dtype=jnp.float32)
    edge_attr = jax.random.normal(ks[15], (E, EDGE_DIM), dtype=jnp.float32)
    # padding mask: True == masked-out node
    node_idx = np.arange(N_NODES)[None, :]
    valid = np.array([60, 80])[:, None]
    mask_bool = jnp.asarray(node_idx >= valid)

    new_x, new_edge = cell_propagation_forward(
        prep, graph_x, mask_bool, edge_attr, edge_counts, cell)
    jax.block_until_ready((new_x, new_edge))

    ref_x, ref_edge = reference_forward(
        params, graph_x, mask_bool, edge_attr, edge_counts, cell)
    assert new_x.shape == (B * N_NODES, NODE_DIM)
    assert new_edge.shape == (E, EDGE_DIM)
    # Node path stays f32 (approx EUP reciprocal -> slightly relaxed vs 5e-5).
    np.testing.assert_allclose(np.asarray(new_x), np.asarray(ref_x),
                               rtol=1e-4, atol=1e-4)
    # Edge MLP uses bf16 MXU operands with f32 accumulation -> looser tolerance
    # vs the pure-f32 reference.
    np.testing.assert_allclose(np.asarray(new_edge), np.asarray(ref_edge),
                               rtol=3e-2, atol=3e-2)
    print("KERNEL_OK")
</pallas_src>

<mosaic_0001>
module attributes {stable_mosaic.version = 11 : i64} {
  func.func @_attn_kernel(%arg0: i32, %arg1: memref<1x100x128xf32, #tpu.memory_space<vmem>>, %arg2: memref<1x1x128xf32, #tpu.memory_space<vmem>>, %arg3: memref<1x1x1xf32, #tpu.memory_space<vmem>>, %arg4: memref<1x1x128xf32, #tpu.memory_space<vmem>>, %arg5: memref<1x1x128xf32, #tpu.memory_space<vmem>>, %arg6: memref<1x100x1xf32, #tpu.memory_space<vmem>>, %arg7: memref<100x1xf32, #tpu.memory_space<vmem>>, %arg8: memref<1x100x128xf32, #tpu.memory_space<vmem>>) attributes {dimension_semantics = [#tpu.dimension_semantics<parallel>], iteration_bounds = array<i64: 2>, scalar_prefetch = 0 : i64, scratch_operands = 0 : i64, tpu.core_type = #tpu.core_type<tc>, window_params = [{transform_indices = @transform_0, window_bounds = array<i64: 1, 100, 128>}, {transform_indices = @transform_1, window_bounds = array<i64: 1, 1, 128>}, {transform_indices = @transform_2, window_bounds = array<i64: 1, 1, 1>}, {transform_indices = @transform_3, window_bounds = array<i64: 1, 1, 128>}, {transform_indices = @transform_4, window_bounds = array<i64: 1, 1, 128>}, {transform_indices = @transform_5, window_bounds = array<i64: 1, 100, 1>}, {pipeline_mode = #tpu.pipeline_mode<synchronous>, transform_indices = @transform_6, window_bounds = array<i64: 100, 1>}, {transform_indices = @transform_7, window_bounds = array<i64: 1, 100, 128>}]} {
    %c0 = arith.constant 0 : index
    %c0_0 = arith.constant 0 : index
    %c0_1 = arith.constant 0 : index
    %0 = vector.load %arg1[%c0, %c0_0, %c0_1] : memref<1x100x128xf32, #tpu.memory_space<vmem>>, vector<1x100x128xf32>
    %c0_2 = arith.constant 0 : index
    %c0_3 = arith.constant 0 : index
    %c0_4 = arith.constant 0 : index
    %1 = vector.load %arg2[%c0_2, %c0_3, %c0_4] : memref<1x1x128xf32, #tpu.memory_space<vmem>>, vector<1x1x128xf32>
    %c0_5 = arith.constant 0 : index
    %c0_6 = arith.constant 0 : index
    %c0_7 = arith.constant 0 : index
    %2 = vector.load %arg3[%c0_5, %c0_6, %c0_7] : memref<1x1x1xf32, #tpu.memory_space<vmem>>, vector<1x1x1xf32>
    %c0_8 = arith.constant 0 : index
    %c0_9 = arith.constant 0 : index
    %c0_10 = arith.constant 0 : index
    %3 = vector.load %arg4[%c0_8, %c0_9, %c0_10] : memref<1x1x128xf32, #tpu.memory_space<vmem>>, vector<1x1x128xf32>
    %c0_11 = arith.constant 0 : index
    %c0_12 = arith.constant 0 : index
    %c0_13 = arith.constant 0 : index
    %4 = vector.load %arg5[%c0_11, %c0_12, %c0_13] : memref<1x1x128xf32, #tpu.memory_space<vmem>>, vector<1x1x128xf32>
    %c0_14 = arith.constant 0 : index
    %c0_15 = arith.constant 0 : index
    %c0_16 = arith.constant 0 : index
    %5 = vector.load %arg6[%c0_14, %c0_15, %c0_16] : memref<1x100x1xf32, #tpu.memory_space<vmem>>, vector<1x100x1xf32>
    %c0_17 = arith.constant 0 : index
    %c0_18 = arith.constant 0 : index
    %6 = vector.load %arg7[%c0_17, %c0_18] : memref<100x1xf32, #tpu.memory_space<vmem>>, vector<100x1xf32>
    %7 = vector.broadcast %1 : vector<1x1x128xf32> to vector<1x100x128xf32>
    %8 = arith.mulf %0, %7 : vector<1x100x128xf32>
    %cst = arith.constant dense<0.000000e+00> : vector<1x100xf32>
    %9 = vector.multi_reduction <add>, %8, %cst [2] : vector<1x100x128xf32> to vector<1x100xf32>
    %10 = vector.shape_cast %9 : vector<1x100xf32> to vector<1x100x1xf32>
    %11 = vector.broadcast %2 : vector<1x1x1xf32> to vector<1x100x1xf32>
    %12 = arith.addf %10, %11 : vector<1x100x1xf32>
    %cst_19 = arith.constant 5.000000e-01 : f32
    %13 = vector.broadcast %cst_19 : f32 to vector<1x100x1xf32>
    %14 = arith.cmpf ogt, %5, %13 : vector<1x100x1xf32>
    %cst_20 = arith.constant -1.000000e+09 : f32
    %15 = vector.broadcast %cst_20 : f32 to vector<1x100x1xf32>
    %16 = arith.select %14, %15, %12 : vector<1x100x1xi1>, vector<1x100x1xf32>
    %cst_21 = arith.constant dense<0xFF800000> : vector<1x1xf32>
    %17 = vector.multi_reduction <maximumf>, %16, %cst_21 [1] : vector<1x100x1xf32> to vector<1x1xf32>
    %18 = vector.shape_cast %17 : vector<1x1xf32> to vector<1x1x1xf32>
    %19 = vector.broadcast %18 : vector<1x1x1xf32> to vector<1x100x1xf32>
    %20 = arith.subf %16, %19 : vector<1x100x1xf32>
    %21 = math.exp %20 : vector<1x100x1xf32>
    %cst_22 = arith.constant dense<0.000000e+00> : vector<1x1xf32>
    %22 = vector.multi_reduction <add>, %21, %cst_22 [1] : vector<1x100x1xf32> to vector<1x1xf32>
    %23 = vector.shape_cast %22 : vector<1x1xf32> to vector<1x1x1xf32>
    %24 = tpu.reciprocal %23 {approx = true} : vector<1x1x1xf32> -> vector<1x1x1xf32>
    %cst_23 = arith.constant 0.0883883461 : f32
    %25 = vector.broadcast %cst_23 : f32 to vector<1x1x1xf32>
    %26 = arith.mulf %24, %25 : vector<1x1x1xf32>
    %27 = vector.broadcast %26 : vector<1x1x1xf32> to vector<1x100x1xf32>
    %28 = arith.mulf %21, %27 : vector<1x100x1xf32>
    %29 = vector.broadcast %28 : vector<1x100x1xf32> to vector<1x100x128xf32>
    %30 = vector.broadcast %3 : vector<1x1x128xf32> to vector<1x100x128xf32>
    %31 = arith.mulf %29, %30 : vector<1x100x128xf32>
    %cst_24 = arith.constant 1.000000e+00 : f32
    %32 = vector.broadcast %cst_24 : f32 to vector<1x100x1xf32>
    %33 = arith.subf %32, %5 : vector<1x100x1xf32>
    %34 = vector.broadcast %33 : vector<1x100x1xf32> to vector<1x100x128xf32>
    %35 = vector.broadcast %4 : vector<1x1x128xf32> to vector<1x100x128xf32>
    %36 = arith.mulf %34, %35 : vector<1x100x128xf32>
    %37 = vector.shape_cast %6 : vector<100x1xf32> to vector<1x100x1xf32>
    %38 = vector.broadcast %37 : vector<1x100x1xf32> to vector<1x100x128xf32>
    %39 = arith.mulf %38, %36 : vector<1x100x128xf32>
    %40 = arith.addf %31, %39 : vector<1x100x128xf32>
    %41 = arith.addf %40, %0 : vector<1x100x128xf32>
    %c0_25 = arith.constant 0 : index
    %c0_26 = arith.constant 0 : index
    %c0_27 = arith.constant 0 : index
    %42 = vector.load %arg8[%c0_25, %c0_26, %c0_27] : memref<1x100x128xf32, #tpu.memory_space<vmem>>, vector<1x100x128xf32>
    tpu.vector_store %arg8[%c0_25, %c0_26, %c0_27], %41 {strides = array<i32>} : memref<1x100x128xf32, #tpu.memory_space<vmem>>, vector<1x100x128xf32>,
    return
  }
  func.func @transform_0(%arg0: i32) -> (i32, i32, i32) {
    %c0_i32 = arith.constant 0 : i32
    %c0_i32_0 = arith.constant 0 : i32
    %c0_i32_1 = arith.constant 0 : i32
    return %arg0, %c0_i32, %c0_i32_0 : i32, i32, i32
  }
  func.func @transform_1(%arg0: i32) -> (i32, i32, i32) {
    %c0_i32 = arith.constant 0 : i32
    %c0_i32_0 = arith.constant 0 : i32
    %c0_i32_1 = arith.constant 0 : i32
    return %arg0, %c0_i32, %c0_i32_0 : i32, i32, i32
  }
  func.func @transform_2(%arg0: i32) -> (i32, i32, i32) {
    %c0_i32 = arith.constant 0 : i32
    %c0_i32_0 = arith.constant 0 : i32
    %c0_i32_1 = arith.constant 0 : i32
    return %arg0, %c0_i32, %c0_i32_0 : i32, i32, i32
  }
  func.func @transform_3(%arg0: i32) -> (i32, i32, i32) {
    %c0_i32 = arith.constant 0 : i32
    %c0_i32_0 = arith.constant 0 : i32
    %c0_i32_1 = arith.constant 0 : i32
    return %arg0, %c0_i32, %c0_i32_0 : i32, i32, i32
  }
  func.func @transform_4(%arg0: i32) -> (i32, i32, i32) {
    %c0_i32 = arith.constant 0 : i32
    %c0_i32_0 = arith.constant 0 : i32
    %c0_i32_1 = arith.constant 0 : i32
    return %arg0, %c0_i32, %c0_i32_0 : i32, i32, i32
  }
  func.func @transform_5(%arg0: i32) -> (i32, i32, i32) {
    %c0_i32 = arith.constant 0 : i32
    %c0_i32_0 = arith.constant 0 : i32
    %c0_i32_1 = arith.constant 0 : i32
    return %arg0, %c0_i32, %c0_i32_0 : i32, i32, i32
  }
  func.func @transform_6(%arg0: i32) -> (i32, i32) {
    %c0_i32 = arith.constant 0 : i32
    %c0_i32_0 = arith.constant 0 : i32
    %c0_i32_1 = arith.constant 0 : i32
    return %c0_i32, %c0_i32_0 : i32, i32
  }
  func.func @transform_7(%arg0: i32) -> (i32, i32, i32) {
    %c0_i32 = arith.constant 0 : i32
    %c0_i32_0 = arith.constant 0 : i32
    %c0_i32_1 = arith.constant 0 : i32
    return %arg0, %c0_i32, %c0_i32_0 : i32, i32, i32
  }
}

</mosaic_0001>

<llo_original>
// kernel: tpu_custom_call.1
$region0: #{tpu_custom_call.1}
  #allocation0 [shape = 'u32[]', space=smem, size = 0x4, offset = 0x4, fixed_abs, tag = 'smem constant byte address 0x4 - core index']
  #allocation1 [shape = 'u32[72,128]{1,0:T(1,128)}', space=vmem, size = 0x9000, scoped, tag = 'internal scratch']
  %s0 = inlined_call_operand.vmem [shape: f32[2,100,128], index: 0, kind: input, shape index: {}]
  %s1 = inlined_call_operand.vmem [shape: f32[2,1,128], index: 1, kind: input, shape index: {}]
  %s2 = inlined_call_operand.vmem [shape: f32[2,1,1], index: 2, kind: input, shape index: {}]
  %s3 = inlined_call_operand.vmem [shape: f32[2,1,128], index: 3, kind: input, shape index: {}]
  %s4 = inlined_call_operand.vmem [shape: f32[2,1,128], index: 4, kind: input, shape index: {}]
  %s5 = inlined_call_operand.vmem [shape: f32[2,100,1], index: 5, kind: input, shape index: {}]
  %s6 = inlined_call_operand.vmem [shape: f32[100,1], index: 6, kind: input, shape index: {}]
  %s7 = inlined_call_operand.vmem [shape: f32[2,100,128], index: 7, kind: output, shape index: {}]
  %s8 = sld [smem:[#allocation0]]
  $region61: #{tpu_custom_call.1} parent=0
    _
  %s10 = ssub.s32 1, %s8
  %s11 = scalar_select 0, %s10, %s8
  loop: start=0, step=1, limit=4
  $region2: #{tpu_custom_call.1} parent=0 // loop_pre_header
    _
  $region3: #{tpu_custom_call.1} parent=0 // loop_header
    %s13 = sphi 0, %s17
    %p14 = scmp.ge.s32.totalorder %s13, 4
    %s23 = sphi 0, %s25
    %s26 = sphi 0, %s23
    %s27 = sphi 0, %s26
    %s43 = sphi 0, %s27
    %s49 = sphi 0, %s51
    %s52 = sphi 0, %s49
    %s53 = sphi 0, %s52
    %s69 = sphi 0, %s53
    %s75 = sphi 0, %s77
    %s78 = sphi 0, %s75
    %s79 = sphi 0, %s78
    %s95 = sphi 0, %s79
    %s101 = sphi 0, %s103
    %s104 = sphi 0, %s101
    %s105 = sphi 0, %s104
    %s121 = sphi 0, %s105
    %s127 = sphi 0, %s129
    %s130 = sphi 0, %s127
    %s131 = sphi 0, %s130
    %s147 = sphi 0, %s131
    %s153 = sphi 0, %s155
    %s156 = sphi 0, %s153
    %s157 = sphi 0, %s156
    %s173 = sphi 0, %s157
    %s177 = sphi 0, %s177
    %s179 = sphi 0, %s177
    %s180 = sphi 0, %s179
    %s194 = sphi 0, %s180
    %s200 = sphi 0, %s202
    %s203 = sphi 0, %s200
    %s204 = sphi 0, %s203
    %s220 = sphi 0, %s204
  $region4: #{tpu_custom_call.1} parent=0 // loop_header_branch
    %16 = sbr.rel (%p14) target = $region8
  $region5: #{tpu_custom_call.1} parent=0 // loop_body
    %s18 = ssub.s32 %s13, 1
    %s19 = ssub.s32 %s13, 2
    %s20 = sadd.s32 %s13, 1
    %s21 = ssub.s32 %s13, %s20
    %p22 = scmp.eq.s32.totalorder %s21, 0
    %s24 = sadd.s32 %s23, 1
    %s25 = scalar_select %p22, %s23, %s24
    %p28 = pneg %p22
    %p29 = scmp.eq.s32.totalorder %s13, 1
    %p30 = por %p28, %p29
    %p31 = scmp.ne.s32.totalorder %s23, %s26
    %p32 = scmp.eq.s32.totalorder %s13, 0
    %p33 = por %p31, %p32
    %p34 = scmp.ne.s32.totalorder %s23, %s26
    %p35 = scmp.eq.s32.totalorder %s18, 1
    %p36 = por %p34, %p35
    %p37 = scmp.ne.s32.totalorder %s26, %s27
    %p38 = scmp.eq.s32.totalorder %s18, 0
    %p39 = por %p37, %p38
    %p40 = scmp.ne.s32.totalorder %s26, %s27
    %p41 = scmp.eq.s32.totalorder %s19, 1
    %p42 = por %p40, %p41
    %p44 = scmp.ne.s32.totalorder %s27, %s43
    %p45 = scmp.eq.s32.totalorder %s19, 0
    %p46 = por %p44, %p45
    %s47 = ssub.s32 %s13, %s20
    %p48 = scmp.eq.s32.totalorder %s47, 0
    %s50 = sadd.s32 %s49, 1
    %s51 = scalar_select %p48, %s49, %s50
    %p54 = pneg %p48
    %p55 = scmp.eq.s32.totalorder %s13, 1
    %p56 = por %p54, %p55
    %p57 = scmp.ne.s32.totalorder %s49, %s52
    %p58 = scmp.eq.s32.totalorder %s13, 0
    %p59 = por %p57, %p58
    %p60 = scmp.ne.s32.totalorder %s49, %s52
    %p61 = scmp.eq.s32.totalorder %s18, 1
    %p62 = por %p60, %p61
    %p63 = scmp.ne.s32.totalorder %s52, %s53
    %p64 = scmp.eq.s32.totalorder %s18, 0
    %p65 = por %p63, %p64
    %p66 = scmp.ne.s32.totalorder %s52, %s53
    %p67 = scmp.eq.s32.totalorder %s19, 1
    %p68 = por %p66, %p67
    %p70 = scmp.ne.s32.totalorder %s53, %s69
    %p71 = scmp.eq.s32.totalorder %s19, 0
    %p72 = por %p70, %p71
    %s73 = ssub.s32 %s13, %s20
    %p74 = scmp.eq.s32.totalorder %s73, 0
    %s76 = sadd.s32 %s75, 1
    %s77 = scalar_select %p74, %s75, %s76
    %p80 = pneg %p74
    %p81 = scmp.eq.s32.totalorder %s13, 1
    %p82 = por %p80, %p81
    %p83 = scmp.ne.s32.totalorder %s75, %s78
    %p84 = scmp.eq.s32.totalorder %s13, 0
    %p85 = por %p83, %p84
    %p86 = scmp.ne.s32.totalorder %s75, %s78
    %p87 = scmp.eq.s32.totalorder %s18, 1
    %p88 = por %p86, %p87
    %p89 = scmp.ne.s32.totalorder %s78, %s79
    %p90 = scmp.eq.s32.totalorder %s18, 0
    %p91 = por %p89, %p90
    %p92 = scmp.ne.s32.totalorder %s78, %s79
    %p93 = scmp.eq.s32.totalorder %s19, 1
    %p94 = por %p92, %p93
    %p96 = scmp.ne.s32.totalorder %s79, %s95
    %p97 = scmp.eq.s32.totalorder %s19, 0
    %p98 = por %p96, %p97
    %s99 = ssub.s32 %s13, %s20
    %p100 = scmp.eq.s32.totalorder %s99, 0
    %s102 = sadd.s32 %s101, 1
    %s103 = scalar_select %p100, %s101, %s102
    %p106 = pneg %p100
    %p107 = scmp.eq.s32.totalorder %s13, 1
    %p108 = por %p106, %p107
    %p109 = scmp.ne.s32.totalorder %s101, %s104
    %p110 = scmp.eq.s32.totalorder %s13, 0
    %p111 = por %p109, %p110
    %p112 = scmp.ne.s32.totalorder %s101, %s104
    %p113 = scmp.eq.s32.totalorder %s18, 1
    %p114 = por %p112, %p113
    %p115 = scmp.ne.s32.totalorder %s104, %s105
    %p116 = scmp.eq.s32.totalorder %s18, 0
    %p117 = por %p115, %p116
    %p118 = scmp.ne.s32.totalorder %s104, %s105
    %p119 = scmp.eq.s32.totalorder %s19, 1
    %p120 = por %p118, %p119
    %p122 = scmp.ne.s32.totalorder %s105, %s121
    %p123 = scmp.eq.s32.totalorder %s19, 0
    %p124 = por %p122, %p123
    %s125 = ssub.s32 %s13, %s20
    %p126 = scmp.eq.s32.totalorder %s125, 0
    %s128 = sadd.s32 %s127, 1
    %s129 = scalar_select %p126, %s127, %s128
    %p132 = pneg %p126
    %p133 = scmp.eq.s32.totalorder %s13, 1
    %p134 = por %p132, %p133
    %p135 = scmp.ne.s32.totalorder %s127, %s130
    %p136 = scmp.eq.s32.totalorder %s13, 0
    %p137 = por %p135, %p136
    %p138 = scmp.ne.s32.totalorder %s127, %s130
    %p139 = scmp.eq.s32.totalorder %s18, 1
    %p140 = por %p138, %p139
    %p141 = scmp.ne.s32.totalorder %s130, %s131
    %p142 = scmp.eq.s32.totalorder %s18, 0
    %p143 = por %p141, %p142
    %p144 = scmp.ne.s32.totalorder %s130, %s131
    %p145 = scmp.eq.s32.totalorder %s19, 1
    %p146 = por %p144, %p145
    %p148 = scmp.ne.s32.totalorder %s131, %s147
    %p149 = scmp.eq.s32.totalorder %s19, 0
    %p150 = por %p148, %p149
    %s151 = ssub.s32 %s13, %s20
    %p152 = scmp.eq.s32.totalorder %s151, 0
    %s154 = sadd.s32 %s153, 1
    %s155 = scalar_select %p152, %s153, %s154
    %p158 = pneg %p152
    %p159 = scmp.eq.s32.totalorder %s13, 1
    %p160 = por %p158, %p159
    %p161 = scmp.ne.s32.totalorder %s153, %s156
    %p162 = scmp.eq.s32.totalorder %s13, 0
    %p163 = por %p161, %p162
    %p164 = scmp.ne.s32.totalorder %s153, %s156
    %p165 = scmp.eq.s32.totalorder %s18, 1
    %p166 = por %p164, %p165
    %p167 = scmp.ne.s32.totalorder %s156, %s157
    %p168 = scmp.eq.s32.totalorder %s18, 0
    %p169 = por %p167, %p168
    %p170 = scmp.ne.s32.totalorder %s156, %s157
    %p171 = scmp.eq.s32.totalorder %s19, 1
    %p172 = por %p170, %p171
    %p174 = scmp.ne.s32.totalorder %s157, %s173
    %p175 = scmp.eq.s32.totalorder %s19, 0
    %p176 = por %p174, %p175
    %s178 = sadd.s32 %s177, 1
    %p181 = scmp.eq.s32.totalorder %s13, 1
    %p182 = scmp.ne.s32.totalorder %s177, %s179
    %p183 = scmp.eq.s32.totalorder %s13, 0
    %p184 = por %p182, %p183
    %p185 = scmp.ne.s32.totalorder %s177, %s179
    %p186 = scmp.eq.s32.totalorder %s18, 1
    %p187 = por %p185, %p186
    %p188 = scmp.ne.s32.totalorder %s179, %s180
    %p189 = scmp.eq.s32.totalorder %s18, 0
    %p190 = por %p188, %p189
    %p191 = scmp.ne.s32.totalorder %s179, %s180
    %p192 = scmp.eq.s32.totalorder %s19, 1
    %p193 = por %p191, %p192
    %p195 = scmp.ne.s32.totalorder %s180, %s194
    %p196 = scmp.eq.s32.totalorder %s19, 0
    %p197 = por %p195, %p196
    %s198 = ssub.s32 %s13, %s20
    %p199 = scmp.eq.s32.totalorder %s198, 0
    %s201 = sadd.s32 %s200, 1
    %s202 = scalar_select %p199, %s200, %s201
    %p205 = pneg %p199
    %p206 = scmp.eq.s32.totalorder %s13, 1
    %p207 = por %p205, %p206
    %p208 = scmp.ne.s32.totalorder %s200, %s203
    %p209 = scmp.eq.s32.totalorder %s13, 0
    %p210 = por %p208, %p209
    %p211 = scmp.ne.s32.totalorder %s200, %s203
    %p212 = scmp.eq.s32.totalorder %s18, 1
    %p213 = por %p211, %p212
    %p214 = scmp.ne.s32.totalorder %s203, %s204
    %p215 = scmp.eq.s32.totalorder %s18, 0
    %p216 = por %p214, %p215
    %p217 = scmp.ne.s32.totalorder %s203, %s204
    %p218 = scmp.eq.s32.totalorder %s19, 1
    %p219 = por %p217, %p218
    %p221 = scmp.ne.s32.totalorder %s204, %s220
    %p222 = scmp.eq.s32.totalorder %s19, 0
    %p223 = por %p221, %p222
    %p224 = scmp.le.s32.totalorder 1, %s13
    %p225 = scmp.lt.s32.totalorder %s13, 3
    %p226 = pnand %p224, %p225
    %p227 = pneg %p226
    // Predicated region
    $region9: #{tpu_custom_call.1} parent=5 // pred_check
      _
    $region10: #{tpu_custom_call.1} parent=5 // pred_check_branch
      %229 = sbr.rel (%p226) target = $region12
    $region11: #{tpu_custom_call.1} parent=5 // pred_region
      %s230 = ssub.s32 %s13, 1
      // Predicated region
      $region13: #{tpu_custom_call.1} parent=11 // pred_check
        %p231 = pneg %p190
      $region14: #{tpu_custom_call.1} parent=11 // pred_check_branch
        %233 = sbr.rel (%p231) target = $region16
      $region15: #{tpu_custom_call.1} parent=11 // pred_region
        _
      $region16: #{tpu_custom_call.1} parent=11 // pred_fallthru
        _
    $region12: #{tpu_custom_call.1} parent=5 // pred_fallthru
      _
    %p234 = scmp.lt.s32.totalorder %s13, 2
    // Predicated region
    $region17: #{tpu_custom_call.1} parent=5 // pred_check
      %p235 = pneg %p234
    $region18: #{tpu_custom_call.1} parent=5 // pred_check_branch
      %237 = sbr.rel (%p235) target = $region20
    $region19: #{tpu_custom_call.1} parent=5 // pred_region
      // Predicated region
      $region21: #{tpu_custom_call.1} parent=19 // pred_check
        %p238 = pneg %p33
      $region22: #{tpu_custom_call.1} parent=19 // pred_check_branch
        %240 = sbr.rel (%p238) target = $region24
      $region23: #{tpu_custom_call.1} parent=19 // pred_region
        %p241 = scmp.lt.s32.totalorder %s13, 1
        %s242 = scalar_select %p241, %s13, 1
        %s243 = smul.addr %s242, 13
        %s244 = smul.addr %s243, 8
        %s245 = scalar_lea.vmem %s0, %s244
      $region24: #{tpu_custom_call.1} parent=19 // pred_fallthru
        _
      // Predicated region
      $region25: #{tpu_custom_call.1} parent=19 // pred_check
        %p246 = pneg %p59
      $region26: #{tpu_custom_call.1} parent=19 // pred_check_branch
        %248 = sbr.rel (%p246) target = $region28
      $region27: #{tpu_custom_call.1} parent=19 // pred_region
        %p249 = scmp.lt.s32.totalorder %s13, 1
        %s250 = scalar_select %p249, %s13, 1
        %s251 = scalar_lea.vmem %s1, %s250
      $region28: #{tpu_custom_call.1} parent=19 // pred_fallthru
        _
      // Predicated region
      $region29: #{tpu_custom_call.1} parent=19 // pred_check
        %p252 = pneg %p85
      $region30: #{tpu_custom_call.1} parent=19 // pred_check_branch
        %254 = sbr.rel (%p252) target = $region32
      $region31: #{tpu_custom_call.1} parent=19 // pred_region
        %p255 = scmp.lt.s32.totalorder %s13, 1
        %s256 = scalar_select %p255, %s13, 1
        %s257 = scalar_lea.vmem %s2, %s256
      $region32: #{tpu_custom_call.1} parent=19 // pred_fallthru
        _
      // Predicated region
      $region33: #{tpu_custom_call.1} parent=19 // pred_check
        %p258 = pneg %p111
      $region34: #{tpu_custom_call.1} parent=19 // pred_check_branch
        %260 = sbr.rel (%p258) target = $region36
      $region35: #{tpu_custom_call.1} parent=19 // pred_region
        %p261 = scmp.lt.s32.totalorder %s13, 1
        %s262 = scalar_select %p261, %s13, 1
        %s263 = scalar_lea.vmem %s3, %s262
      $region36: #{tpu_custom_call.1} parent=19 // pred_fallthru
        _
      // Predicated region
      $region37: #{tpu_custom_call.1} parent=19 // pred_check
        %p264 = pneg %p137
      $region38: #{tpu_custom_call.1} parent=19 // pred_check_branch
        %266 = sbr.rel (%p264) target = $region40
      $region39: #{tpu_custom_call.1} parent=19 // pred_region
        %p267 = scmp.lt.s32.totalorder %s13, 1
        %s268 = scalar_select %p267, %s13, 1
        %s269 = scalar_lea.vmem %s4, %s268
      $region40: #{tpu_custom_call.1} parent=19 // pred_fallthru
        _
      // Predicated region
      $region41: #{tpu_custom_call.1} parent=19 // pred_check
        %p270 = pneg %p163
      $region42: #{tpu_custom_call.1} parent=19 // pred_check_branch
        %272 = sbr.rel (%p270) target = $region44
      $region43: #{tpu_custom_call.1} parent=19 // pred_region
        %p273 = scmp.lt.s32.totalorder %s13, 1
        %s274 = scalar_select %p273, %s13, 1
        %s275 = smul.addr %s274, 13
        %s276 = smul.addr %s275, 8
        %s277 = scalar_lea.vmem %s5, %s276
      $region44: #{tpu_custom_call.1} parent=19 // pred_fallthru
        _
    $region20: #{tpu_custom_call.1} parent=5 // pred_fallthru
      _
    %p278 = scmp.le.s32.totalorder 1, %s13
    %p279 = scmp.lt.s32.totalorder %s13, 3
    %p280 = pnand %p278, %p279
    %p281 = pneg %p280
    // Predicated region
    $region45: #{tpu_custom_call.1} parent=5 // pred_check
      _
    $region46: #{tpu_custom_call.1} parent=5 // pred_check_branch
      %283 = sbr.rel (%p280) target = $region48
    $region47: #{tpu_custom_call.1} parent=5 // pred_region
      %s284 = ssub.s32 %s13, 1
      %p285 = scmp.lt.s32.totalorder %s18, 1
      %s286 = scalar_select %p285, %s18, 1
      %s287 = smul.addr %s286, 13
      %s288 = smul.addr %s287, 8
      %s289 = scalar_lea.vmem %s0, %s288
      %p290 = pneg %p39
      %p291 = pneg %p36
      %p292 = scmp.lt.s32.totalorder %s18, 1
      %s293 = scalar_select %p292, %s18, 1
      %s294 = scalar_lea.vmem %s1, %s293
      %p295 = pneg %p65
      %p296 = pneg %p62
      %p297 = scmp.lt.s32.totalorder %s18, 1
      %s298 = scalar_select %p297, %s18, 1
      %s299 = scalar_lea.vmem %s2, %s298
      %p300 = pneg %p91
      %p301 = pneg %p88
      %p302 = scmp.lt.s32.totalorder %s18, 1
      %s303 = scalar_select %p302, %s18, 1
      %s304 = scalar_lea.vmem %s3, %s303
      %p305 = pneg %p117
      %p306 = pneg %p114
      %p307 = scmp.lt.s32.totalorder %s18, 1
      %s308 = scalar_select %p307, %s18, 1
      %s309 = scalar_lea.vmem %s4, %s308
      %p310 = pneg %p143
      %p311 = pneg %p140
      %p312 = scmp.lt.s32.totalorder %s18, 1
      %s313 = scalar_select %p312, %s18, 1
      %s314 = smul.addr %s313, 13
      %s315 = smul.addr %s314, 8
      %s316 = scalar_lea.vmem %s5, %s315
      %p317 = pneg %p169
      %p318 = pneg %p166
      %p319 = pneg %p190
      %p320 = pneg %p187
      %p321 = pneg %p216
      %p322 = pneg %p213
      %p323 = scmp.lt.s32.totalorder %s18, 1
      %s324 = scalar_select %p323, %s18, 1
      %s325 = smul.addr %s324, 13
      %s326 = smul.addr %s325, 8
      %s327 = scalar_lea.vmem %s7, %s326
      %p328 = scmp.lt.s32.totalorder %s18, 1
      %s329 = scalar_select %p328, %s18, 1
      %s330 = smul.addr %s329, 13
      %s331 = smul.addr %s330, 8
      %s332 = scalar_lea.vmem %s0, %s331
      %p333 = scmp.lt.s32.totalorder %s18, 1
      %s334 = scalar_select %p333, %s18, 1
      %s335 = scalar_lea.vmem %s1, %s334
      %p336 = scmp.lt.s32.totalorder %s18, 1
      %s337 = scalar_select %p336, %s18, 1
      %s338 = scalar_lea.vmem %s2, %s337
      %p339 = scmp.lt.s32.totalorder %s18, 1
      %s340 = scalar_select %p339, %s18, 1
      %s341 = scalar_lea.vmem %s3, %s340
      %p342 = scmp.lt.s32.totalorder %s18, 1
      %s343 = scalar_select %p342, %s18, 1
      %s344 = scalar_lea.vmem %s4, %s343
      %p345 = scmp.lt.s32.totalorder %s18, 1
      %s346 = scalar_select %p345, %s18, 1
      %s347 = smul.addr %s346, 13
      %s348 = smul.addr %s347, 8
      %s349 = scalar_lea.vmem %s5, %s348
      %p350 = scmp.lt.s32.totalorder %s18, 1
      %s351 = scalar_select %p350, %s18, 1
      %s352 = smul.addr %s351, 13
      %s353 = smul.addr %s352, 8
      %s354 = scalar_lea.vmem %s7, %s353
      %v355 = vld [vmem:[%s332] sm:$0xff]
      %v356 = vld [vmem:[%s332 + $0x8] sm:$0xff]
      %v357 = vld [vmem:[%s332 + $0x10] sm:$0xff]
      %v358 = vld [vmem:[%s332 + $0x18] sm:$0xff]
      %v359 = vld [vmem:[%s332 + $0x20] sm:$0xff]
      %v360 = vld [vmem:[%s332 + $0x28] sm:$0xff]
      %v361 = vld [vmem:[%s332 + $0x30] sm:$0xff]
      %v362 = vld [vmem:[%s332 + $0x38] sm:$0xff]
      %v363 = vld [vmem:[%s332 + $0x40] sm:$0xff]
      %v364 = vld [vmem:[%s332 + $0x48] sm:$0xff]
      %v365 = vld [vmem:[%s332 + $0x50] sm:$0xff]
      %v366 = vld [vmem:[%s332 + $0x58] sm:$0xff]
      %v367 = vld [vmem:[%s332 + $0x60] sm:$0xf]
      %v368 = vld [vmem:[%s335] sm:$0x1]
      %v369 = vld [vmem:[%s338] sm:$0x1]
      %v370 = vld [vmem:[%s341] sm:$0x1]
      %v371 = vld [vmem:[%s344] sm:$0x1]
      %v372 = vld [vmem:[%s349] sm:$0xff]
      %v373 = vld [vmem:[%s349 + $0x8] sm:$0xff]
      %v374 = vld [vmem:[%s349 + $0x10] sm:$0xff]
      %v375 = vld [vmem:[%s349 + $0x18] sm:$0xff]
      %v376 = vld [vmem:[%s349 + $0x20] sm:$0xff]
      %v377 = vld [vmem:[%s349 + $0x28] sm:$0xff]
      %v378 = vld [vmem:[%s349 + $0x30] sm:$0xff]
      %v379 = vld [vmem:[%s349 + $0x38] sm:$0xff]
      %v380 = vld [vmem:[%s349 + $0x40] sm:$0xff]
      %v381 = vld [vmem:[%s349 + $0x48] sm:$0xff]
      %v382 = vld [vmem:[%s349 + $0x50] sm:$0xff]
      %v383 = vld [vmem:[%s349 + $0x58] sm:$0xff]
      %v384 = vld [vmem:[%s349 + $0x60] sm:$0xf]
      %v385 = vld [vmem:[%s6] sm:$0xff]
      %v386 = vld [vmem:[%s6 + $0x8] sm:$0xff]
      %v387 = vld [vmem:[%s6 + $0x10] sm:$0xff]
      %v388 = vld [vmem:[%s6 + $0x18] sm:$0xff]
      %v389 = vld [vmem:[%s6 + $0x20] sm:$0xff]
      %v390 = vld [vmem:[%s6 + $0x28] sm:$0xff]
      %v391 = vld [vmem:[%s6 + $0x30] sm:$0xff]
      %v392 = vld [vmem:[%s6 + $0x38] sm:$0xff]
      %v393 = vld [vmem:[%s6 + $0x40] sm:$0xff]
      %v394 = vld [vmem:[%s6 + $0x48] sm:$0xff]
      %v395 = vld [vmem:[%s6 + $0x50] sm:$0xff]
      %v396 = vld [vmem:[%s6 + $0x58] sm:$0xff]
      %v397 = vld [vmem:[%s6 + $0x60] sm:$0xf]
      %v399 = vperm.slane %v368, 0
      %v401 = vmul.f32 %v355, %v399
      %v402 = vmul.f32 %v356, %v399
      %v403 = vmul.f32 %v357, %v399
      %v404 = vmul.f32 %v358, %v399
      %v405 = vmul.f32 %v359, %v399
      %v406 = vmul.f32 %v360, %v399
      %v407 = vmul.f32 %v361, %v399
      %v408 = vmul.f32 %v362, %v399
      %v409 = vmul.f32 %v363, %v399
      %v410 = vmul.f32 %v364, %v399
      %v411 = vmul.f32 %v365, %v399
      %v412 = vmul.f32 %v366, %v399
      %v413 = vmul.f32 %v367, %v399
      %414 = vadd.xlane.f32.xlu0 %v401
      %v415 = vpop.xlane.xlu0 %414
      %416 = vadd.xlane.f32.xlu0 %v402
      %v417 = vpop.xlane.xlu0 %416
      %418 = vadd.xlane.f32.xlu0 %v403
      %v419 = vpop.xlane.xlu0 %418
      %420 = vadd.xlane.f32.xlu0 %v404
      %v421 = vpop.xlane.xlu0 %420
      %422 = vadd.xlane.f32.xlu0 %v405
      %v423 = vpop.xlane.xlu0 %422
      %424 = vadd.xlane.f32.xlu0 %v406
      %v425 = vpop.xlane.xlu0 %424
      %426 = vadd.xlane.f32.xlu0 %v407
      %v427 = vpop.xlane.xlu0 %426
      %428 = vadd.xlane.f32.xlu0 %v408
      %v429 = vpop.xlane.xlu0 %428
      %430 = vadd.xlane.f32.xlu0 %v409
      %v431 = vpop.xlane.xlu0 %430
      %432 = vadd.xlane.f32.xlu0 %v410
      %v433 = vpop.xlane.xlu0 %432
      %434 = vadd.xlane.f32.xlu0 %v411
      %v435 = vpop.xlane.xlu0 %434
      %436 = vadd.xlane.f32.xlu0 %v412
      %v437 = vpop.xlane.xlu0 %436
      %vm438 = vcmask 1043456
      %v439 = vsel %vm438, %v413, 0.0
      %440 = vadd.xlane.f32.xlu0 %v439
      %v441 = vpop.xlane.xlu0 %440
      %v443 = vperm.slane %v369, 0
      %v445 = vadd.f32 %v415, %v443
      %v446 = vadd.f32 %v417, %v443
      %v447 = vadd.f32 %v419, %v443
      %v448 = vadd.f32 %v421, %v443
      %v449 = vadd.f32 %v423, %v443
      %v450 = vadd.f32 %v425, %v443
      %v451 = vadd.f32 %v427, %v443
      %v452 = vadd.f32 %v429, %v443
      %v453 = vadd.f32 %v431, %v443
      %v454 = vadd.f32 %v433, %v443
      %v455 = vadd.f32 %v435, %v443
      %v456 = vadd.f32 %v437, %v443
      %v457 = vadd.f32 %v441, %v443
      %vm458 = vcmp.gt.f32.partialorder %v372, 0.5
      %vm459 = vcmp.gt.f32.partialorder %v373, 0.5
      %vm460 = vcmp.gt.f32.partialorder %v374, 0.5
      %vm461 = vcmp.gt.f32.partialorder %v375, 0.5
      %vm462 = vcmp.gt.f32.partialorder %v376, 0.5
      %vm463 = vcmp.gt.f32.partialorder %v377, 0.5
      %vm464 = vcmp.gt.f32.partialorder %v378, 0.5
      %vm465 = vcmp.gt.f32.partialorder %v379, 0.5
      %vm466 = vcmp.gt.f32.partialorder %v380, 0.5
      %vm467 = vcmp.gt.f32.partialorder %v381, 0.5
      %vm468 = vcmp.gt.f32.partialorder %v382, 0.5
      %vm469 = vcmp.gt.f32.partialorder %v383, 0.5
      %vm470 = vcmp.gt.f32.partialorder %v384, 0.5
      %v471 = vsel %vm458, -1e+09, %v445
      %v472 = vsel %vm459, -1e+09, %v446
      %v473 = vsel %vm460, -1e+09, %v447
      %v474 = vsel %vm461, -1e+09, %v448
      %v475 = vsel %vm462, -1e+09, %v449
      %v476 = vsel %vm463, -1e+09, %v450
      %v477 = vsel %vm464, -1e+09, %v451
      %v478 = vsel %vm465, -1e+09, %v452
      %v479 = vsel %vm466, -1e+09, %v453
      %v480 = vsel %vm467, -1e+09, %v454
      %v481 = vsel %vm468, -1e+09, %v455
      %v482 = vsel %vm469, -1e+09, %v456
      %v483 = vsel %vm470, -1e+09, %v457
      %vm484 = vcmask 7168
      %v485 = vsel %vm484, %v471, -inf
      %v486 = vsel %vm484, %v472, -inf
      %v487 = vsel %vm484, %v473, -inf
      %v488 = vsel %vm484, %v474, -inf
      %v489 = vsel %vm484, %v475, -inf
      %v490 = vmax.f32 %v485, %v489
      %v491 = vsel %vm484, %v476, -inf
      %v492 = vmax.f32 %v486, %v491
      %v493 = vsel %vm484, %v477, -inf
      %v494 = vmax.f32 %v487, %v493
      %v495 = vsel %vm484, %v478, -inf
      %v496 = vmax.f32 %v488, %v495
      %v497 = vsel %vm484, %v479, -inf
      %v498 = vmax.f32 %v490, %v497
      %v499 = vsel %vm484, %v480, -inf
      %v500 = vmax.f32 %v492, %v499
      %v501 = vsel %vm484, %v481, -inf
      %v502 = vmax.f32 %v494, %v501
      %v503 = vsel %vm484, %v482, -inf
      %v504 = vmax.f32 %v496, %v503
      %vm505 = vcmask 3072
      %v506 = vsel %vm505, %v483, -inf
      %v507 = vmax.f32 %v498, %v506
      %v508 = vmax.f32 %v507, %v500
      %v509 = vmax.f32 %v502, %v504
      %v510 = vmax.f32 %v508, %v509
      %v511 = vrot.slane %v510, 4
      %v512 = vmax.f32 %v510, %v511
      %v513 = vrot.slane %v512, 2
      %v514 = vmax.f32 %v512, %v513
      %v515 = vrot.slane %v514, 1
      %v516 = vmax.f32 %v514, %v515
      %v517 = vsub.f32 %v471, %v516
      %v518 = vsub.f32 %v472, %v516
      %v519 = vsub.f32 %v473, %v516
      %v520 = vsub.f32 %v474, %v516
      %v521 = vsub.f32 %v475, %v516
      %v522 = vsub.f32 %v476, %v516
      %v523 = vsub.f32 %v477, %v516
      %v524 = vsub.f32 %v478, %v516
      %v525 = vsub.f32 %v479, %v516
      %v526 = vsub.f32 %v480, %v516
      %v527 = vsub.f32 %v481, %v516
      %v528 = vsub.f32 %v482, %v516
      %v529 = vsub.f32 %v483, %v516
      %v530 = vmul.f32 %v517, 1.442695
      %v531 = vpow.pop %v530
      %v532 = vmul.f32 %v518, 1.442695
      %v533 = vpow.pop %v532
      %v534 = vmul.f32 %v519, 1.442695
      %v535 = vpow.pop %v534
      %v536 = vmul.f32 %v520, 1.442695
      %v537 = vpow.pop %v536
      %v538 = vmul.f32 %v521, 1.442695
      %v539 = vpow.pop %v538
      %v540 = vmul.f32 %v522, 1.442695
      %v541 = vpow.pop %v540
      %v542 = vmul.f32 %v523, 1.442695
      %v543 = vpow.pop %v542
      %v544 = vmul.f32 %v524, 1.442695
      %v545 = vpow.pop %v544
      %v546 = vmul.f32 %v525, 1.442695
      %v547 = vpow.pop %v546
      %v548 = vmul.f32 %v526, 1.442695
      %v549 = vpow.pop %v548
      %v550 = vmul.f32 %v527, 1.442695
      %v551 = vpow.pop %v550
      %v552 = vmul.f32 %v528, 1.442695
      %v553 = vpow.pop %v552
      %v554 = vmul.f32 %v529, 1.442695
      %v555 = vpow.pop %v554
      %v556 = vsel %vm484, %v531, 0.0
      %v557 = vsel %vm484, %v533, 0.0
      %v558 = vadd.f32 %v556, %v557
      %v559 = vsel %vm484, %v535, 0.0
      %v560 = vadd.f32 %v558, %v559
      %v561 = vsel %vm484, %v537, 0.0
      %v562 = vadd.f32 %v560, %v561
      %v563 = vsel %vm484, %v539, 0.0
      %v564 = vadd.f32 %v562, %v563
      %v565 = vsel %vm484, %v541, 0.0
      %v566 = vadd.f32 %v564, %v565
      %v567 = vsel %vm484, %v543, 0.0
      %v568 = vadd.f32 %v566, %v567
      %v569 = vsel %vm484, %v545, 0.0
      %v570 = vadd.f32 %v568, %v569
      %v571 = vsel %vm484, %v547, 0.0
      %v572 = vadd.f32 %v570, %v571
      %v573 = vsel %vm484, %v549, 0.0
      %v574 = vadd.f32 %v572, %v573
      %v575 = vsel %vm484, %v551, 0.0
      %v576 = vadd.f32 %v574, %v575
      %v577 = vsel %vm484, %v553, 0.0
      %v578 = vadd.f32 %v576, %v577
      %v579 = vsel %vm505, %v555, 0.0
      %v580 = vadd.f32 %v578, %v579
      %v581 = vrot.slane %v580, 4
      %v582 = vadd.f32 %v580, %v581
      %v583 = vrot.slane %v582, 2
      %v584 = vadd.f32 %v582, %v583
      %v585 = vrot.slane %v584, 1
      %v586 = vadd.f32 %v584, %v585
      %v587 = vrcp.pop %v586
      %v588 = vmul.f32 %v587, 0.088388346
      %v589 = vmul.f32 %v531, %v588
      %v590 = vmul.f32 %v533, %v588
      %v591 = vmul.f32 %v535, %v588
      %v592 = vmul.f32 %v537, %v588
      %v593 = vmul.f32 %v539, %v588
      %v594 = vmul.f32 %v541, %v588
      %v595 = vmul.f32 %v543, %v588
      %v596 = vmul.f32 %v545, %v588
      %v597 = vmul.f32 %v547, %v588
      %v598 = vmul.f32 %v549, %v588
      %v599 = vmul.f32 %v551, %v588
      %v600 = vmul.f32 %v553, %v588
      %v601 = vmul.f32 %v555, %v588
      %603 = vset.pattern.permute.xlu0 0
      %604 = vperm.xlu0 %603, %v589
      %v605 = vpop.permute.xlu0 %604
      %608 = vset.pattern.permute.xlu0 0
      %609 = vperm.xlu0 %608, %v590
      %v610 = vpop.permute.xlu0 %609
      %613 = vset.pattern.permute.xlu0 0
      %614 = vperm.xlu0 %613, %v591
      %v615 = vpop.permute.xlu0 %614
      %618 = vset.pattern.permute.xlu0 0
      %619 = vperm.xlu0 %618, %v592
      %v620 = vpop.permute.xlu0 %619
      %623 = vset.pattern.permute.xlu0 0
      %624 = vperm.xlu0 %623, %v593
      %v625 = vpop.permute.xlu0 %624
      %628 = vset.pattern.permute.xlu0 0
      %629 = vperm.xlu0 %628, %v594
      %v630 = vpop.permute.xlu0 %629
      %633 = vset.pattern.permute.xlu0 0
      %634 = vperm.xlu0 %633, %v595
      %v635 = vpop.permute.xlu0 %634
      %638 = vset.pattern.permute.xlu0 0
      %639 = vperm.xlu0 %638, %v596
      %v640 = vpop.permute.xlu0 %639
      %643 = vset.pattern.permute.xlu0 0
      %644 = vperm.xlu0 %643, %v597
      %v645 = vpop.permute.xlu0 %644
      %648 = vset.pattern.permute.xlu0 0
      %649 = vperm.xlu0 %648, %v598
      %v650 = vpop.permute.xlu0 %649
      %653 = vset.pattern.permute.xlu0 0
      %654 = vperm.xlu0 %653, %v599
      %v655 = vpop.permute.xlu0 %654
      %658 = vset.pattern.permute.xlu0 0
      %659 = vperm.xlu0 %658, %v600
      %v660 = vpop.permute.xlu0 %659
      %663 = vset.pattern.permute.xlu0 0
      %664 = vperm.xlu0 %663, %v601
      %v665 = vpop.permute.xlu0 %664
      %v668 = vperm.slane %v370, 0
      %v670 = vmul.f32 %v605, %v668
      %v671 = vmul.f32 %v610, %v668
      %v672 = vmul.f32 %v615, %v668
      %v673 = vmul.f32 %v620, %v668
      %v674 = vmul.f32 %v625, %v668
      %v675 = vmul.f32 %v630, %v668
      %v676 = vmul.f32 %v635, %v668
      %v677 = vmul.f32 %v640, %v668
      %v678 = vmul.f32 %v645, %v668
      %v679 = vmul.f32 %v650, %v668
      %v680 = vmul.f32 %v655, %v668
      %v681 = vmul.f32 %v660, %v668
      %v682 = vmul.f32 %v665, %v668
      %v683 = vsub.f32 1.0, %v372
      %v684 = vsub.f32 1.0, %v373
      %v685 = vsub.f32 1.0, %v374
      %v686 = vsub.f32 1.0, %v375
      %v687 = vsub.f32 1.0, %v376
      %v688 = vsub.f32 1.0, %v377
      %v689 = vsub.f32 1.0, %v378
      %v690 = vsub.f32 1.0, %v379
      %v691 = vsub.f32 1.0, %v380
      %v692 = vsub.f32 1.0, %v381
      %v693 = vsub.f32 1.0, %v382
      %v694 = vsub.f32 1.0, %v383
      %v695 = vsub.f32 1.0, %v384
      %697 = vset.pattern.permute.xlu0 0
      %698 = vperm.xlu0 %697, %v683
      %v699 = vpop.permute.xlu0 %698
      %702 = vset.pattern.permute.xlu0 0
      %703 = vperm.xlu0 %702, %v684
      %v704 = vpop.permute.xlu0 %703
      %707 = vset.pattern.permute.xlu0 0
      %708 = vperm.xlu0 %707, %v685
      %v709 = vpop.permute.xlu0 %708
      %712 = vset.pattern.permute.xlu0 0
      %713 = vperm.xlu0 %712, %v686
      %v714 = vpop.permute.xlu0 %713
      %717 = vset.pattern.permute.xlu0 0
      %718 = vperm.xlu0 %717, %v687
      %v719 = vpop.permute.xlu0 %718
      %722 = vset.pattern.permute.xlu0 0
      %723 = vperm.xlu0 %722, %v688
      %v724 = vpop.permute.xlu0 %723
      %727 = vset.pattern.permute.xlu0 0
      %728 = vperm.xlu0 %727, %v689
      %v729 = vpop.permute.xlu0 %728
      %732 = vset.pattern.permute.xlu0 0
      %733 = vperm.xlu0 %732, %v690
      %v734 = vpop.permute.xlu0 %733
      %737 = vset.pattern.permute.xlu0 0
      %738 = vperm.xlu0 %737, %v691
      %v739 = vpop.permute.xlu0 %738
      %742 = vset.pattern.permute.xlu0 0
      %743 = vperm.xlu0 %742, %v692
      %v744 = vpop.permute.xlu0 %743
      %747 = vset.pattern.permute.xlu0 0
      %748 = vperm.xlu0 %747, %v693
      %v749 = vpop.permute.xlu0 %748
      %752 = vset.pattern.permute.xlu0 0
      %753 = vperm.xlu0 %752, %v694
      %v754 = vpop.permute.xlu0 %753
      %757 = vset.pattern.permute.xlu0 0
      %758 = vperm.xlu0 %757, %v695
      %v759 = vpop.permute.xlu0 %758
      %v762 = vperm.slane %v371, 0
      %v764 = vmul.f32 %v699, %v762
      %v765 = vmul.f32 %v704, %v762
      %v766 = vmul.f32 %v709, %v762
      %v767 = vmul.f32 %v714, %v762
      %v768 = vmul.f32 %v719, %v762
      %v769 = vmul.f32 %v724, %v762
      %v770 = vmul.f32 %v729, %v762
      %v771 = vmul.f32 %v734, %v762
      %v772 = vmul.f32 %v739, %v762
      %v773 = vmul.f32 %v744, %v762
      %v774 = vmul.f32 %v749, %v762
      %v775 = vmul.f32 %v754, %v762
      %v776 = vmul.f32 %v759, %v762
      %778 = vset.pattern.permute.xlu0 0
      %779 = vperm.xlu0 %778, %v385
      %v780 = vpop.permute.xlu0 %779
      %783 = vset.pattern.permute.xlu0 0
      %784 = vperm.xlu0 %783, %v386
      %v785 = vpop.permute.xlu0 %784
      %788 = vset.pattern.permute.xlu0 0
      %789 = vperm.xlu0 %788, %v387
      %v790 = vpop.permute.xlu0 %789
      %793 = vset.pattern.permute.xlu0 0
      %794 = vperm.xlu0 %793, %v388
      %v795 = vpop.permute.xlu0 %794
      %798 = vset.pattern.permute.xlu0 0
      %799 = vperm.xlu0 %798, %v389
      %v800 = vpop.permute.xlu0 %799
      %803 = vset.pattern.permute.xlu0 0
      %804 = vperm.xlu0 %803, %v390
      %v805 = vpop.permute.xlu0 %804
      %808 = vset.pattern.permute.xlu0 0
      %809 = vperm.xlu0 %808, %v391
      %v810 = vpop.permute.xlu0 %809
      %813 = vset.pattern.permute.xlu0 0
      %814 = vperm.xlu0 %813, %v392
      %v815 = vpop.permute.xlu0 %814
      %818 = vset.pattern.permute.xlu0 0
      %819 = vperm.xlu0 %818, %v393
      %v820 = vpop.permute.xlu0 %819
      %823 = vset.pattern.permute.xlu0 0
      %824 = vperm.xlu0 %823, %v394
      %v825 = vpop.permute.xlu0 %824
      %828 = vset.pattern.permute.xlu0 0
      %829 = vperm.xlu0 %828, %v395
      %v830 = vpop.permute.xlu0 %829
      %833 = vset.pattern.permute.xlu0 0
      %834 = vperm.xlu0 %833, %v396
      %v835 = vpop.permute.xlu0 %834
      %838 = vset.pattern.permute.xlu0 0
      %839 = vperm.xlu0 %838, %v397
      %v840 = vpop.permute.xlu0 %839
      %v842 = vmul.f32 %v780, %v764
      %v843 = vmul.f32 %v785, %v765
      %v844 = vmul.f32 %v790, %v766
      %v845 = vmul.f32 %v795, %v767
      %v846 = vmul.f32 %v800, %v768
      %v847 = vmul.f32 %v805, %v769
      %v848 = vmul.f32 %v810, %v770
      %v849 = vmul.f32 %v815, %v771
      %v850 = vmul.f32 %v820, %v772
      %v851 = vmul.f32 %v825, %v773
      %v852 = vmul.f32 %v830, %v774
      %v853 = vmul.f32 %v835, %v775
      %v854 = vmul.f32 %v840, %v776
      %v855 = vadd.f32 %v670, %v842
      %v856 = vadd.f32 %v671, %v843
      %v857 = vadd.f32 %v672, %v844
      %v858 = vadd.f32 %v673, %v845
      %v859 = vadd.f32 %v674, %v846
      %v860 = vadd.f32 %v675, %v847
      %v861 = vadd.f32 %v676, %v848
      %v862 = vadd.f32 %v677, %v849
      %v863 = vadd.f32 %v678, %v850
      %v864 = vadd.f32 %v679, %v851
      %v865 = vadd.f32 %v680, %v852
      %v866 = vadd.f32 %v681, %v853
      %v867 = vadd.f32 %v682, %v854
      %v868 = vadd.f32 %v855, %v355
      %v869 = vadd.f32 %v856, %v356
      %v870 = vadd.f32 %v857, %v357
      %v871 = vadd.f32 %v858, %v358
      %v872 = vadd.f32 %v859, %v359
      %v873 = vadd.f32 %v860, %v360
      %v874 = vadd.f32 %v861, %v361
      %v875 = vadd.f32 %v862, %v362
      %v876 = vadd.f32 %v863, %v363
      %v877 = vadd.f32 %v864, %v364
      %v878 = vadd.f32 %v865, %v365
      %v879 = vadd.f32 %v866, %v366
      %v880 = vadd.f32 %v867, %v367
      %881 = vst [vmem:[%s354] sm:$0xff] %v868
      %882 = vst [vmem:[%s354 + $0x8] sm:$0xff] %v869
      %883 = vst [vmem:[%s354 + $0x10] sm:$0xff] %v870
      %884 = vst [vmem:[%s354 + $0x18] sm:$0xff] %v871
      %885 = vst [vmem:[%s354 + $0x20] sm:$0xff] %v872
      %886 = vst [vmem:[%s354 + $0x28] sm:$0xff] %v873
      %887 = vst [vmem:[%s354 + $0x30] sm:$0xff] %v874
      %888 = vst [vmem:[%s354 + $0x38] sm:$0xff] %v875
      %889 = vst [vmem:[%s354 + $0x40] sm:$0xff] %v876
      %890 = vst [vmem:[%s354 + $0x48] sm:$0xff] %v877
      %891 = vst [vmem:[%s354 + $0x50] sm:$0xff] %v878
      %892 = vst [vmem:[%s354 + $0x58] sm:$0xff] %v879
      %893 = vst [vmem:[%s354 + $0x60] sm:$0xf] %v880
      %p894 = scmp.lt.s32.totalorder %s18, 1
      %s895 = scalar_select %p894, %s18, 1
      %s896 = smul.addr %s895, 13
      %s897 = smul.addr %s896, 8
      %s898 = scalar_lea.vmem %s7, %s897
      // Predicated region
      $region49: #{tpu_custom_call.1} parent=47 // pred_check
        %p899 = pneg %p213
      $region50: #{tpu_custom_call.1} parent=47 // pred_check_branch
        %901 = sbr.rel (%p899) target = $region52
      $region51: #{tpu_custom_call.1} parent=47 // pred_region
        _
      $region52: #{tpu_custom_call.1} parent=47 // pred_fallthru
        _
    $region48: #{tpu_custom_call.1} parent=5 // pred_fallthru
      _
    %p902 = scmp.le.s32.totalorder 2, %s13
    // Predicated region
    $region53: #{tpu_custom_call.1} parent=5 // pred_check
      %p903 = pneg %p902
    $region54: #{tpu_custom_call.1} parent=5 // pred_check_branch
      %905 = sbr.rel (%p903) target = $region56
    $region55: #{tpu_custom_call.1} parent=5 // pred_region
      %s906 = ssub.s32 %s13, 2
      // Predicated region
      $region57: #{tpu_custom_call.1} parent=55 // pred_check
        %p907 = pneg %p219
      $region58: #{tpu_custom_call.1} parent=55 // pred_check_branch
        %909 = sbr.rel (%p907) target = $region60
      $region59: #{tpu_custom_call.1} parent=55 // pred_region
        %p910 = scmp.lt.s32.totalorder %s19, 1
        %s911 = scalar_select %p910, %s19, 1
        %s912 = smul.addr %s911, 13
        %s913 = smul.addr %s912, 8
        %s914 = scalar_lea.vmem %s7, %s913
      $region60: #{tpu_custom_call.1} parent=55 // pred_fallthru
        _
    $region56: #{tpu_custom_call.1} parent=5 // pred_fallthru
      _
  $region6: #{tpu_custom_call.1} parent=0 // loop_footer
    %s17 = sadd.s32 1, %s13
  $region7: #{tpu_custom_call.1} parent=0 // loop_footer_branch
    %12 = sbr.rel target = $region3
  $region8: #{tpu_custom_call.1} parent=0 // loop_exit
    _

</llo_original>
